<compile_context>
chip_gen: v7x
topology: tpu7x:2x2x1
jax: 0.10.0
libtpu: 0.0.40
codegen_flags: <defaults>
</compile_context>

<pallas_src>
import jax
import jax.numpy as jnp
from jax import lax
from jax.experimental import pallas as pl
from jax.experimental.pallas import tpu as pltpu

POOL = 5          # MaxPool1d kernel size & stride
K = 5             # Conv1d kernel size
PAD = K // 2      # Conv1d padding = 2
SUB = 8           # sublane multiple


def _round_up(n, m):
    return (n + m - 1) // m * m


def down_kernel(x_ref, w1_ref, b1_ref, w2_ref, b2_ref, o_ref):
    """Fused (conv + folded-BN + ReLU) x2 on one max-pooled batch element.

    x_ref : (1, C_in_p, L)       pooled input, channels on sublanes, L on lanes
    w1_ref: (C_mid_p, K*C_in_p)  BN-folded conv1 weights, im2col layout
    b1_ref: (C_mid_p, 1)
    w2_ref: (C_out_p, K*C_mid_p)
    b2_ref: (C_out_p, 1)
    o_ref : (1, C_out_p, L)
    """
    L = o_ref.shape[2]

    def conv_bn_relu(x, w, b):
        # x: (C, L), C a multiple of 8.  Build the K lane-shifted, boundary-
        # masked taps in registers, stack them on the sublane axis (aligned
        # concat) and contract everything with a single MXU dot.
        C = x.shape[0]
        lane = lax.broadcasted_iota(jnp.int32, (C, L), 1)
        taps = []
        for k in range(K):
            d = k - PAD                              # tap offset along L
            if d == 0:
                taps.append(x)
            else:
                shifted = pltpu.roll(x, shift=(-d) % L, axis=1)
                valid = (lane + d >= 0) & (lane + d < L)
                taps.append(jnp.where(valid, shifted, 0.0))
        xcol = jnp.concatenate(taps, axis=0)         # (K*C, L)
        acc = jnp.dot(w, xcol, preferred_element_type=jnp.float32)
        return jnp.maximum(acc + b, 0.0)             # (C_out, L)

    h = conv_bn_relu(x_ref[0], w1_ref[...], b1_ref[...])
    o_ref[0] = conv_bn_relu(h, w2_ref[...], b2_ref[...]).astype(o_ref.dtype)


def _fold_bn_im2col(w, b_conv, gamma, beta, mean, var, eps, cin_p, cout_p):
    """Fold inference-mode BatchNorm1d into Conv1d weights/bias, pad channels
    to sublane multiples and reshape to the kernel's im2col layout.

    w: (C_out, C_in, K) PyTorch layout -> ((cout_p, K*cin_p), (cout_p, 1)).
    """
    c_out, c_in, _ = w.shape
    s = gamma / jnp.sqrt(var + eps)                                  # (C_out,)
    w_f = w * s[:, None, None]
    b_f = b_conv * s + beta - mean * s
    # Zero-pad channels; padded rows/cols contribute nothing.
    w_f = jnp.pad(w_f, ((0, cout_p - c_out), (0, cin_p - c_in), (0, 0)))
    b_f = jnp.pad(b_f, ((0, cout_p - c_out),))
    # im2col column index = k * cin_p + c  (matches the kernel's tap order).
    w_f = jnp.transpose(w_f, (0, 2, 1)).reshape(cout_p, K * cin_p)
    return w_f.astype(jnp.float32), b_f[:, None].astype(jnp.float32)


def down_forward(x,
                 w1, b1, gamma1, beta1, mean1, var1,
                 w2, b2, gamma2, beta2, mean2, var2,
                 eps=1e-5):
    """x: (N, C_in, L_in) float32, PyTorch NCL. Returns (N, C_out, L_in // 5)."""
    N, C_in, L_in = x.shape
    C_mid = w1.shape[0]
    C_out = w2.shape[0]
    L = L_in // POOL

    C_in_p = _round_up(C_in, SUB)
    C_mid_p = _round_up(C_mid, SUB)
    C_out_p = _round_up(C_out, SUB)

    # MaxPool1d(5) (floor mode): drop the tail, reshape + max in the wrapper
    # (lane-friendly layout plumbing; 5x less data DMA'd into the kernel).
    xp = x[:, :, :L * POOL].reshape(N, C_in, L, POOL).max(axis=3)    # (N,C_in,L)
    xp = jnp.pad(xp, ((0, 0), (0, C_in_p - C_in), (0, 0)))           # pad sublanes

    w1f, b1f = _fold_bn_im2col(w1, b1, gamma1, beta1, mean1, var1, eps,
                               C_in_p, C_mid_p)
    w2f, b2f = _fold_bn_im2col(w2, b2, gamma2, beta2, mean2, var2, eps,
                               C_mid_p, C_out_p)

    out = pl.pallas_call(
        down_kernel,
        out_shape=jax.ShapeDtypeStruct((N, C_out_p, L), jnp.float32),
        grid_spec=pltpu.PrefetchScalarGridSpec(
            num_scalar_prefetch=0,
            grid=(N,),
            in_specs=[
                pl.BlockSpec((1, C_in_p, L), lambda n: (n, 0, 0)),
                pl.BlockSpec((C_mid_p, K * C_in_p), lambda n: (0, 0)),
                pl.BlockSpec((C_mid_p, 1), lambda n: (0, 0)),
                pl.BlockSpec((C_out_p, K * C_mid_p), lambda n: (0, 0)),
                pl.BlockSpec((C_out_p, 1), lambda n: (0, 0)),
            ],
            out_specs=pl.BlockSpec((1, C_out_p, L), lambda n: (n, 0, 0)),
        ),
        compiler_params=pltpu.CompilerParams(
            dimension_semantics=("parallel",)),
    )(xp, w1f, b1f, w2f, b2f)

    return out if C_out_p == C_out else out[:, :C_out, :]


def ref_forward(x,
                w1, b1, gamma1, beta1, mean1, var1,
                w2, b2, gamma2, beta2, mean2, var2,
                eps=1e-5):
    """Plain-JAX reference (explicit, unfolded inference-mode BatchNorm)."""
    N, C_in, L_in = x.shape
    L = L_in // POOL
    xp = x[:, :, :L * POOL].reshape(N, C_in, L, POOL).max(axis=3)    # (N,C_in,L)

    def conv_bn_relu(y, w, bc, g, be, rm, rv):
        ypad = jnp.pad(y, ((0, 0), (0, 0), (PAD, PAD)))
        out = jnp.zeros((N, w.shape[0], L), jnp.float32)
        for k in range(K):
            out = out + jnp.einsum("ncl,oc->nol", ypad[:, :, k:k + L], w[:, :, k])
        out = out + bc[None, :, None]
        out = (out - rm[None, :, None]) / jnp.sqrt(rv[None, :, None] + eps)
        out = out * g[None, :, None] + be[None, :, None]
        return jnp.maximum(out, 0.0)

    h = conv_bn_relu(xp, w1, b1, gamma1, beta1, mean1, var1)
    return conv_bn_relu(h, w2, b2, gamma2, beta2, mean2, var2)


if __name__ == "__main__":
    N, C_in, C_out, L_in = 2, 4, 8, 80      # pooled length = 16
    C_mid = C_out

    key = jax.random.PRNGKey(0)
    ks = jax.random.split(key, 13)
    x = jax.random.normal(ks[0], (N, C_in, L_in), jnp.float32)

    # PyTorch-layout conv weights: (C_out, C_in, K)
    w1 = 0.1 * jax.random.normal(ks[1], (C_mid, C_in, K), jnp.float32)
    b1 = 0.1 * jax.random.normal(ks[2], (C_mid,), jnp.float32)
    gamma1 = 1.0 + 0.1 * jax.random.normal(ks[3], (C_mid,), jnp.float32)
    beta1 = 0.1 * jax.random.normal(ks[4], (C_mid,), jnp.float32)
    mean1 = 0.1 * jax.random.normal(ks[5], (C_mid,), jnp.float32)
    var1 = 1.0 + 0.1 * jax.random.uniform(ks[6], (C_mid,), jnp.float32)

    w2 = 0.1 * jax.random.normal(ks[7], (C_out, C_mid, K), jnp.float32)
    b2 = 0.1 * jax.random.normal(ks[8], (C_out,), jnp.float32)
    gamma2 = 1.0 + 0.1 * jax.random.normal(ks[9], (C_out,), jnp.float32)
    beta2 = 0.1 * jax.random.normal(ks[10], (C_out,), jnp.float32)
    mean2 = 0.1 * jax.random.normal(ks[11], (C_out,), jnp.float32)
    var2 = 1.0 + 0.1 * jax.random.uniform(ks[12], (C_out,), jnp.float32)

    out = down_forward(x, w1, b1, gamma1, beta1, mean1, var1,
                       w2, b2, gamma2, beta2, mean2, var2)
    out = jax.block_until_ready(out)

    ref = ref_forward(x, w1, b1, gamma1, beta1, mean1, var1,
                      w2, b2, gamma2, beta2, mean2, var2)
    assert out.shape == (N, C_out, L_in // POOL), out.shape
    err = float(jnp.max(jnp.abs(out - ref)))
    assert jnp.allclose(out, ref, rtol=1e-4, atol=1e-4), err

    print("KERNEL_OK")
</pallas_src>

<mosaic_0001>
module attributes {stable_mosaic.version = 11 : i64} {
  func.func @down_kernel(%arg0: i32, %arg1: memref<1x8x16xf32, #tpu.memory_space<vmem>>, %arg2: memref<8x40xf32, #tpu.memory_space<vmem>>, %arg3: memref<8x1xf32, #tpu.memory_space<vmem>>, %arg4: memref<8x40xf32, #tpu.memory_space<vmem>>, %arg5: memref<8x1xf32, #tpu.memory_space<vmem>>, %arg6: memref<1x8x16xf32, #tpu.memory_space<vmem>>) attributes {dimension_semantics = [#tpu.dimension_semantics<parallel>], iteration_bounds = array<i64: 2>, scalar_prefetch = 0 : i64, scratch_operands = 0 : i64, tpu.core_type = #tpu.core_type<tc>, window_params = [{transform_indices = @transform_0, window_bounds = array<i64: 1, 8, 16>}, {pipeline_mode = #tpu.pipeline_mode<synchronous>, transform_indices = @transform_1, window_bounds = array<i64: 8, 40>}, {pipeline_mode = #tpu.pipeline_mode<synchronous>, transform_indices = @transform_2, window_bounds = array<i64: 8, 1>}, {pipeline_mode = #tpu.pipeline_mode<synchronous>, transform_indices = @transform_3, window_bounds = array<i64: 8, 40>}, {pipeline_mode = #tpu.pipeline_mode<synchronous>, transform_indices = @transform_4, window_bounds = array<i64: 8, 1>}, {transform_indices = @transform_5, window_bounds = array<i64: 1, 8, 16>}]} {
    %c0 = arith.constant 0 : index
    %c0_0 = arith.constant 0 : index
    %c0_1 = arith.constant 0 : index
    %0 = vector.load %arg1[%c0, %c0_0, %c0_1] : memref<1x8x16xf32, #tpu.memory_space<vmem>>, vector<1x8x16xf32>
    %1 = vector.shape_cast %0 : vector<1x8x16xf32> to vector<8x16xf32>
    %c0_2 = arith.constant 0 : index
    %c0_3 = arith.constant 0 : index
    %2 = vector.load %arg2[%c0_2, %c0_3] : memref<8x40xf32, #tpu.memory_space<vmem>>, vector<8x40xf32>
    %c0_4 = arith.constant 0 : index
    %c0_5 = arith.constant 0 : index
    %3 = vector.load %arg3[%c0_4, %c0_5] : memref<8x1xf32, #tpu.memory_space<vmem>>, vector<8x1xf32>
    %4 = tpu.iota {dimensions = array<i32: 1>} : vector<8x16xi32>
    %c2_i32 = arith.constant 2 : i32
    %5 = tpu.dynamic_rotate %1 by %c2_i32 dim 1 : vector<8x16xf32>, i32 -> vector<8x16xf32>
    %c-2_i32 = arith.constant -2 : i32
    %6 = vector.broadcast %c-2_i32 : i32 to vector<8x16xi32>
    %7 = arith.addi %4, %6 : vector<8x16xi32>
    %c0_i32 = arith.constant 0 : i32
    %8 = vector.broadcast %c0_i32 : i32 to vector<8x16xi32>
    %9 = arith.cmpi sge, %7, %8 : vector<8x16xi32>
    %c-2_i32_6 = arith.constant -2 : i32
    %10 = vector.broadcast %c-2_i32_6 : i32 to vector<8x16xi32>
    %11 = arith.addi %4, %10 : vector<8x16xi32>
    %c16_i32 = arith.constant 16 : i32
    %12 = vector.broadcast %c16_i32 : i32 to vector<8x16xi32>
    %13 = arith.cmpi slt, %11, %12 : vector<8x16xi32>
    %14 = arith.andi %9, %13 : vector<8x16xi1>
    %cst = arith.constant 0.000000e+00 : f32
    %15 = vector.broadcast %cst : f32 to vector<8x16xf32>
    %16 = arith.select %14, %5, %15 : vector<8x16xi1>, vector<8x16xf32>
    %c1_i32 = arith.constant 1 : i32
    %17 = tpu.dynamic_rotate %1 by %c1_i32 dim 1 : vector<8x16xf32>, i32 -> vector<8x16xf32>
    %c-1_i32 = arith.constant -1 : i32
    %18 = vector.broadcast %c-1_i32 : i32 to vector<8x16xi32>
    %19 = arith.addi %4, %18 : vector<8x16xi32>
    %c0_i32_7 = arith.constant 0 : i32
    %20 = vector.broadcast %c0_i32_7 : i32 to vector<8x16xi32>
    %21 = arith.cmpi sge, %19, %20 : vector<8x16xi32>
    %c-1_i32_8 = arith.constant -1 : i32
    %22 = vector.broadcast %c-1_i32_8 : i32 to vector<8x16xi32>
    %23 = arith.addi %4, %22 : vector<8x16xi32>
    %c16_i32_9 = arith.constant 16 : i32
    %24 = vector.broadcast %c16_i32_9 : i32 to vector<8x16xi32>
    %25 = arith.cmpi slt, %23, %24 : vector<8x16xi32>
    %26 = arith.andi %21, %25 : vector<8x16xi1>
    %cst_10 = arith.constant 0.000000e+00 : f32
    %27 = vector.broadcast %cst_10 : f32 to vector<8x16xf32>
    %28 = arith.select %26, %17, %27 : vector<8x16xi1>, vector<8x16xf32>
    %c15_i32 = arith.constant 15 : i32
    %29 = tpu.dynamic_rotate %1 by %c15_i32 dim 1 : vector<8x16xf32>, i32 -> vector<8x16xf32>
    %c1_i32_11 = arith.constant 1 : i32
    %30 = vector.broadcast %c1_i32_11 : i32 to vector<8x16xi32>
    %31 = arith.addi %4, %30 : vector<8x16xi32>
    %c0_i32_12 = arith.constant 0 : i32
    %32 = vector.broadcast %c0_i32_12 : i32 to vector<8x16xi32>
    %33 = arith.cmpi sge, %31, %32 : vector<8x16xi32>
    %c1_i32_13 = arith.constant 1 : i32
    %34 = vector.broadcast %c1_i32_13 : i32 to vector<8x16xi32>
    %35 = arith.addi %4, %34 : vector<8x16xi32>
    %c16_i32_14 = arith.constant 16 : i32
    %36 = vector.broadcast %c16_i32_14 : i32 to vector<8x16xi32>
    %37 = arith.cmpi slt, %35, %36 : vector<8x16xi32>
    %38 = arith.andi %33, %37 : vector<8x16xi1>
    %cst_15 = arith.constant 0.000000e+00 : f32
    %39 = vector.broadcast %cst_15 : f32 to vector<8x16xf32>
    %40 = arith.select %38, %29, %39 : vector<8x16xi1>, vector<8x16xf32>
    %c14_i32 = arith.constant 14 : i32
    %41 = tpu.dynamic_rotate %1 by %c14_i32 dim 1 : vector<8x16xf32>, i32 -> vector<8x16xf32>
    %c2_i32_16 = arith.constant 2 : i32
    %42 = vector.broadcast %c2_i32_16 : i32 to vector<8x16xi32>
    %43 = arith.addi %4, %42 : vector<8x16xi32>
    %c0_i32_17 = arith.constant 0 : i32
    %44 = vector.broadcast %c0_i32_17 : i32 to vector<8x16xi32>
    %45 = arith.cmpi sge, %43, %44 : vector<8x16xi32>
    %c2_i32_18 = arith.constant 2 : i32
    %46 = vector.broadcast %c2_i32_18 : i32 to vector<8x16xi32>
    %47 = arith.addi %4, %46 : vector<8x16xi32>
    %c16_i32_19 = arith.constant 16 : i32
    %48 = vector.broadcast %c16_i32_19 : i32 to vector<8x16xi32>
    %49 = arith.cmpi slt, %47, %48 : vector<8x16xi32>
    %50 = arith.andi %45, %49 : vector<8x16xi1>
    %cst_20 = arith.constant 0.000000e+00 : f32
    %51 = vector.broadcast %cst_20 : f32 to vector<8x16xf32>
    %52 = arith.select %50, %41, %51 : vector<8x16xi1>, vector<8x16xf32>
    %53 = tpu.concatenate %16, %28, %1, %40, %52 in 0 : vector<8x16xf32>, vector<8x16xf32>, vector<8x16xf32>, vector<8x16xf32>, vector<8x16xf32> -> vector<40x16xf32>
    %cst_21 = arith.constant dense<0.000000e+00> : vector<8x16xf32>
    %54 = tpu.matmul %2, %53, %cst_21 {dimension_numbers = #tpu.dot_dimension_numbers<[1], [0], [0], [1], [0, 0, 1, 1], [], []>} : vector<8x40xf32>, vector<40x16xf32>, vector<8x16xf32> -> vector<8x16xf32>
    %55 = vector.broadcast %3 : vector<8x1xf32> to vector<8x16xf32>
    %56 = arith.addf %54, %55 : vector<8x16xf32>
    %cst_22 = arith.constant 0.000000e+00 : f32
    %57 = vector.broadcast %cst_22 : f32 to vector<8x16xf32>
    %58 = arith.maximumf %56, %57 : vector<8x16xf32>
    %c0_23 = arith.constant 0 : index
    %c0_24 = arith.constant 0 : index
    %59 = vector.load %arg4[%c0_23, %c0_24] : memref<8x40xf32, #tpu.memory_space<vmem>>, vector<8x40xf32>
    %c0_25 = arith.constant 0 : index
    %c0_26 = arith.constant 0 : index
    %60 = vector.load %arg5[%c0_25, %c0_26] : memref<8x1xf32, #tpu.memory_space<vmem>>, vector<8x1xf32>
    %61 = tpu.iota {dimensions = array<i32: 1>} : vector<8x16xi32>
    %c2_i32_27 = arith.constant 2 : i32
    %62 = tpu.dynamic_rotate %58 by %c2_i32_27 dim 1 : vector<8x16xf32>, i32 -> vector<8x16xf32>
    %c-2_i32_28 = arith.constant -2 : i32
    %63 = vector.broadcast %c-2_i32_28 : i32 to vector<8x16xi32>
    %64 = arith.addi %61, %63 : vector<8x16xi32>
    %c0_i32_29 = arith.constant 0 : i32
    %65 = vector.broadcast %c0_i32_29 : i32 to vector<8x16xi32>
    %66 = arith.cmpi sge, %64, %65 : vector<8x16xi32>
    %c-2_i32_30 = arith.constant -2 : i32
    %67 = vector.broadcast %c-2_i32_30 : i32 to vector<8x16xi32>
    %68 = arith.addi %61, %67 : vector<8x16xi32>
    %c16_i32_31 = arith.constant 16 : i32
    %69 = vector.broadcast %c16_i32_31 : i32 to vector<8x16xi32>
    %70 = arith.cmpi slt, %68, %69 : vector<8x16xi32>
    %71 = arith.andi %66, %70 : vector<8x16xi1>
    %cst_32 = arith.constant 0.000000e+00 : f32
    %72 = vector.broadcast %cst_32 : f32 to vector<8x16xf32>
    %73 = arith.select %71, %62, %72 : vector<8x16xi1>, vector<8x16xf32>
    %c1_i32_33 = arith.constant 1 : i32
    %74 = tpu.dynamic_rotate %58 by %c1_i32_33 dim 1 : vector<8x16xf32>, i32 -> vector<8x16xf32>
    %c-1_i32_34 = arith.constant -1 : i32
    %75 = vector.broadcast %c-1_i32_34 : i32 to vector<8x16xi32>
    %76 = arith.addi %61, %75 : vector<8x16xi32>
    %c0_i32_35 = arith.constant 0 : i32
    %77 = vector.broadcast %c0_i32_35 : i32 to vector<8x16xi32>
    %78 = arith.cmpi sge, %76, %77 : vector<8x16xi32>
    %c-1_i32_36 = arith.constant -1 : i32
    %79 = vector.broadcast %c-1_i32_36 : i32 to vector<8x16xi32>
    %80 = arith.addi %61, %79 : vector<8x16xi32>
    %c16_i32_37 = arith.constant 16 : i32
    %81 = vector.broadcast %c16_i32_37 : i32 to vector<8x16xi32>
    %82 = arith.cmpi slt, %80, %81 : vector<8x16xi32>
    %83 = arith.andi %78, %82 : vector<8x16xi1>
    %cst_38 = arith.constant 0.000000e+00 : f32
    %84 = vector.broadcast %cst_38 : f32 to vector<8x16xf32>
    %85 = arith.select %83, %74, %84 : vector<8x16xi1>, vector<8x16xf32>
    %c15_i32_39 = arith.constant 15 : i32
    %86 = tpu.dynamic_rotate %58 by %c15_i32_39 dim 1 : vector<8x16xf32>, i32 -> vector<8x16xf32>
    %c1_i32_40 = arith.constant 1 : i32
    %87 = vector.broadcast %c1_i32_40 : i32 to vector<8x16xi32>
    %88 = arith.addi %61, %87 : vector<8x16xi32>
    %c0_i32_41 = arith.constant 0 : i32
    %89 = vector.broadcast %c0_i32_41 : i32 to vector<8x16xi32>
    %90 = arith.cmpi sge, %88, %89 : vector<8x16xi32>
    %c1_i32_42 = arith.constant 1 : i32
    %91 = vector.broadcast %c1_i32_42 : i32 to vector<8x16xi32>
    %92 = arith.addi %61, %91 : vector<8x16xi32>
    %c16_i32_43 = arith.constant 16 : i32
    %93 = vector.broadcast %c16_i32_43 : i32 to vector<8x16xi32>
    %94 = arith.cmpi slt, %92, %93 : vector<8x16xi32>
    %95 = arith.andi %90, %94 : vector<8x16xi1>
    %cst_44 = arith.constant 0.000000e+00 : f32
    %96 = vector.broadcast %cst_44 : f32 to vector<8x16xf32>
    %97 = arith.select %95, %86, %96 : vector<8x16xi1>, vector<8x16xf32>
    %c14_i32_45 = arith.constant 14 : i32
    %98 = tpu.dynamic_rotate %58 by %c14_i32_45 dim 1 : vector<8x16xf32>, i32 -> vector<8x16xf32>
    %c2_i32_46 = arith.constant 2 : i32
    %99 = vector.broadcast %c2_i32_46 : i32 to vector<8x16xi32>
    %100 = arith.addi %61, %99 : vector<8x16xi32>
    %c0_i32_47 = arith.constant 0 : i32
    %101 = vector.broadcast %c0_i32_47 : i32 to vector<8x16xi32>
    %102 = arith.cmpi sge, %100, %101 : vector<8x16xi32>
    %c2_i32_48 = arith.constant 2 : i32
    %103 = vector.broadcast %c2_i32_48 : i32 to vector<8x16xi32>
    %104 = arith.addi %61, %103 : vector<8x16xi32>
    %c16_i32_49 = arith.constant 16 : i32
    %105 = vector.broadcast %c16_i32_49 : i32 to vector<8x16xi32>
    %106 = arith.cmpi slt, %104, %105 : vector<8x16xi32>
    %107 = arith.andi %102, %106 : vector<8x16xi1>
    %cst_50 = arith.constant 0.000000e+00 : f32
    %108 = vector.broadcast %cst_50 : f32 to vector<8x16xf32>
    %109 = arith.select %107, %98, %108 : vector<8x16xi1>, vector<8x16xf32>
    %110 = tpu.concatenate %73, %85, %58, %97, %109 in 0 : vector<8x16xf32>, vector<8x16xf32>, vector<8x16xf32>, vector<8x16xf32>, vector<8x16xf32> -> vector<40x16xf32>
    %cst_51 = arith.constant dense<0.000000e+00> : vector<8x16xf32>
    %111 = tpu.matmul %59, %110, %cst_51 {dimension_numbers = #tpu.dot_dimension_numbers<[1], [0], [0], [1], [0, 0, 1, 1], [], []>} : vector<8x40xf32>, vector<40x16xf32>, vector<8x16xf32> -> vector<8x16xf32>
    %112 = vector.broadcast %60 : vector<8x1xf32> to vector<8x16xf32>
    %113 = arith.addf %111, %112 : vector<8x16xf32>
    %cst_52 = arith.constant 0.000000e+00 : f32
    %114 = vector.broadcast %cst_52 : f32 to vector<8x16xf32>
    %115 = arith.maximumf %113, %114 : vector<8x16xf32>
    %c0_53 = arith.constant 0 : index
    %c0_54 = arith.constant 0 : index
    %c0_55 = arith.constant 0 : index
    %116 = vector.load %arg6[%c0_53, %c0_54, %c0_55] : memref<1x8x16xf32, #tpu.memory_space<vmem>>, vector<1x8x16xf32>
    %117 = vector.shape_cast %116 : vector<1x8x16xf32> to vector<8x16xf32>
    %118 = vector.shape_cast %115 : vector<8x16xf32> to vector<1x8x16xf32>
    tpu.vector_store %arg6[%c0_53, %c0_54, %c0_55], %118 {strides = array<i32>} : memref<1x8x16xf32, #tpu.memory_space<vmem>>, vector<1x8x16xf32>,
    return
  }
  func.func @transform_0(%arg0: i32) -> (i32, i32, i32) {
    %c0_i32 = arith.constant 0 : i32
    %c0_i32_0 = arith.constant 0 : i32
    %c0_i32_1 = arith.constant 0 : i32
    return %arg0, %c0_i32, %c0_i32_0 : i32, i32, i32
  }
  func.func @transform_1(%arg0: i32) -> (i32, i32) {
    %c0_i32 = arith.constant 0 : i32
    %c0_i32_0 = arith.constant 0 : i32
    %c0_i32_1 = arith.constant 0 : i32
    return %c0_i32, %c0_i32_0 : i32, i32
  }
  func.func @transform_2(%arg0: i32) -> (i32, i32) {
    %c0_i32 = arith.constant 0 : i32
    %c0_i32_0 = arith.constant 0 : i32
    %c0_i32_1 = arith.constant 0 : i32
    return %c0_i32, %c0_i32_0 : i32, i32
  }
  func.func @transform_3(%arg0: i32) -> (i32, i32) {
    %c0_i32 = arith.constant 0 : i32
    %c0_i32_0 = arith.constant 0 : i32
    %c0_i32_1 = arith.constant 0 : i32
    return %c0_i32, %c0_i32_0 : i32, i32
  }
  func.func @transform_4(%arg0: i32) -> (i32, i32) {
    %c0_i32 = arith.constant 0 : i32
    %c0_i32_0 = arith.constant 0 : i32
    %c0_i32_1 = arith.constant 0 : i32
    return %c0_i32, %c0_i32_0 : i32, i32
  }
  func.func @transform_5(%arg0: i32) -> (i32, i32, i32) {
    %c0_i32 = arith.constant 0 : i32
    %c0_i32_0 = arith.constant 0 : i32
    %c0_i32_1 = arith.constant 0 : i32
    return %arg0, %c0_i32, %c0_i32_0 : i32, i32, i32
  }
}

</mosaic_0001>

<llo_original>
// kernel: tpu_custom_call.1
$region0: #{tpu_custom_call.1}
  #allocation0 [shape = 'u32[]', space=smem, size = 0x4, offset = 0x4, fixed_abs, tag = 'smem constant byte address 0x4 - core index']
  #allocation1 [shape = 'u32[144,128]{1,0:T(1,128)}', space=vmem, size = 0x12000, scoped, tag = 'internal scratch']
  %s0 = inlined_call_operand.vmem [shape: f32[2,8,16], index: 0, kind: input, shape index: {}]
  %s1 = inlined_call_operand.hbm [shape: f32[8,40], index: 1, kind: input, shape index: {}]
  %s2 = inlined_call_operand.vmem [shape: f32[8,1], index: 2, kind: input, shape index: {}]
  %s3 = inlined_call_operand.vmem [shape: f32[8,40], index: 3, kind: input, shape index: {}]
  %s4 = inlined_call_operand.vmem [shape: f32[8,1], index: 4, kind: input, shape index: {}]
  %s5 = inlined_call_operand.hbm [shape: f32[2,8,16], index: 5, kind: output, shape index: {}]
  %s6 = sld [smem:[#allocation0]]
  $region57: #{tpu_custom_call.1} parent=0
    _
  %s8 = ssub.s32 1, %s6
  %s9 = scalar_select 0, %s8, %s6
  $region1: #{tpu_custom_call.1} parent=0
    #allocation2 [shape = 'u8[4096]{0}', space=vmem, size = 0x1000, scoped, tag = 'input window, operand 1, single buffered']
    #allocation3 [shape = 's32[2]{0}', space=sflag, size = 0x8, scoped, tag = 'scoped memory for tpu_custom_call.1']
    #allocation4 [shape = 's32[2]{0}', space=sflag, size = 0x8, scoped, tag = 'scoped memory for tpu_custom_call.1']
    #allocation5 [shape = 'u8[8192]{0}', space=vmem, size = 0x2000, scoped, tag = 'output window, operand 0']
    %10 = vsyncpa [#allocation3], 0
    %11 = vsyncpa [#allocation4], 0
    %s12 = scalar_lea.sflag [#allocation4], 1
    %13 = vsyncpa %s12, 0
    loop: start=0, step=1, limit=4
    $region2: #{tpu_custom_call.1} parent=1 // loop_pre_header
      _
    $region3: #{tpu_custom_call.1} parent=1 // loop_header
      %s15 = sphi 0, %s19
      %p16 = scmp.ge.s32.totalorder %s15, 4
      %s25 = sphi 0, %s27
      %s28 = sphi 0, %s25
      %s29 = sphi 0, %s28
      %s45 = sphi 0, %s29
      %s49 = sphi 0, %s49
      %s51 = sphi 0, %s49
      %s52 = sphi 0, %s51
      %s66 = sphi 0, %s52
      %s70 = sphi 0, %s70
      %s72 = sphi 0, %s70
      %s73 = sphi 0, %s72
      %s87 = sphi 0, %s73
      %s91 = sphi 0, %s91
      %s93 = sphi 0, %s91
      %s94 = sphi 0, %s93
      %s108 = sphi 0, %s94
      %s112 = sphi 0, %s112
      %s114 = sphi 0, %s112
      %s115 = sphi 0, %s114
      %s129 = sphi 0, %s115
      %s135 = sphi 0, %s137
      %s138 = sphi 0, %s135
      %s139 = sphi 0, %s138
      %s155 = sphi 0, %s139
    $region4: #{tpu_custom_call.1} parent=1 // loop_header_branch
      %18 = sbr.rel (%p16) target = $region8
    $region5: #{tpu_custom_call.1} parent=1 // loop_body
      %s20 = ssub.s32 %s15, 1
      %s21 = ssub.s32 %s15, 2
      %s22 = sadd.s32 %s15, 1
      %s23 = ssub.s32 %s15, %s22
      %p24 = scmp.eq.s32.totalorder %s23, 0
      %s26 = sadd.s32 %s25, 1
      %s27 = scalar_select %p24, %s25, %s26
      %p30 = pneg %p24
      %p31 = scmp.eq.s32.totalorder %s15, 1
      %p32 = por %p30, %p31
      %p33 = scmp.ne.s32.totalorder %s25, %s28
      %p34 = scmp.eq.s32.totalorder %s15, 0
      %p35 = por %p33, %p34
      %p36 = scmp.ne.s32.totalorder %s25, %s28
      %p37 = scmp.eq.s32.totalorder %s20, 1
      %p38 = por %p36, %p37
      %p39 = scmp.ne.s32.totalorder %s28, %s29
      %p40 = scmp.eq.s32.totalorder %s20, 0
      %p41 = por %p39, %p40
      %p42 = scmp.ne.s32.totalorder %s28, %s29
      %p43 = scmp.eq.s32.totalorder %s21, 1
      %p44 = por %p42, %p43
      %p46 = scmp.ne.s32.totalorder %s29, %s45
      %p47 = scmp.eq.s32.totalorder %s21, 0
      %p48 = por %p46, %p47
      %s50 = sadd.s32 %s49, 1
      %p53 = scmp.eq.s32.totalorder %s15, 1
      %p54 = scmp.ne.s32.totalorder %s49, %s51
      %p55 = scmp.eq.s32.totalorder %s15, 0
      %p56 = por %p54, %p55
      %p57 = scmp.ne.s32.totalorder %s49, %s51
      %p58 = scmp.eq.s32.totalorder %s20, 1
      %p59 = por %p57, %p58
      %p60 = scmp.ne.s32.totalorder %s51, %s52
      %p61 = scmp.eq.s32.totalorder %s20, 0
      %p62 = por %p60, %p61
      %p63 = scmp.ne.s32.totalorder %s51, %s52
      %p64 = scmp.eq.s32.totalorder %s21, 1
      %p65 = por %p63, %p64
      %p67 = scmp.ne.s32.totalorder %s52, %s66
      %p68 = scmp.eq.s32.totalorder %s21, 0
      %p69 = por %p67, %p68
      %s71 = sadd.s32 %s70, 1
      %p74 = scmp.eq.s32.totalorder %s15, 1
      %p75 = scmp.ne.s32.totalorder %s70, %s72
      %p76 = scmp.eq.s32.totalorder %s15, 0
      %p77 = por %p75, %p76
      %p78 = scmp.ne.s32.totalorder %s70, %s72
      %p79 = scmp.eq.s32.totalorder %s20, 1
      %p80 = por %p78, %p79
      %p81 = scmp.ne.s32.totalorder %s72, %s73
      %p82 = scmp.eq.s32.totalorder %s20, 0
      %p83 = por %p81, %p82
      %p84 = scmp.ne.s32.totalorder %s72, %s73
      %p85 = scmp.eq.s32.totalorder %s21, 1
      %p86 = por %p84, %p85
      %p88 = scmp.ne.s32.totalorder %s73, %s87
      %p89 = scmp.eq.s32.totalorder %s21, 0
      %p90 = por %p88, %p89
      %s92 = sadd.s32 %s91, 1
      %p95 = scmp.eq.s32.totalorder %s15, 1
      %p96 = scmp.ne.s32.totalorder %s91, %s93
      %p97 = scmp.eq.s32.totalorder %s15, 0
      %p98 = por %p96, %p97
      %p99 = scmp.ne.s32.totalorder %s91, %s93
      %p100 = scmp.eq.s32.totalorder %s20, 1
      %p101 = por %p99, %p100
      %p102 = scmp.ne.s32.totalorder %s93, %s94
      %p103 = scmp.eq.s32.totalorder %s20, 0
      %p104 = por %p102, %p103
      %p105 = scmp.ne.s32.totalorder %s93, %s94
      %p106 = scmp.eq.s32.totalorder %s21, 1
      %p107 = por %p105, %p106
      %p109 = scmp.ne.s32.totalorder %s94, %s108
      %p110 = scmp.eq.s32.totalorder %s21, 0
      %p111 = por %p109, %p110
      %s113 = sadd.s32 %s112, 1
      %p116 = scmp.eq.s32.totalorder %s15, 1
      %p117 = scmp.ne.s32.totalorder %s112, %s114
      %p118 = scmp.eq.s32.totalorder %s15, 0
      %p119 = por %p117, %p118
      %p120 = scmp.ne.s32.totalorder %s112, %s114
      %p121 = scmp.eq.s32.totalorder %s20, 1
      %p122 = por %p120, %p121
      %p123 = scmp.ne.s32.totalorder %s114, %s115
      %p124 = scmp.eq.s32.totalorder %s20, 0
      %p125 = por %p123, %p124
      %p126 = scmp.ne.s32.totalorder %s114, %s115
      %p127 = scmp.eq.s32.totalorder %s21, 1
      %p128 = por %p126, %p127
      %p130 = scmp.ne.s32.totalorder %s115, %s129
      %p131 = scmp.eq.s32.totalorder %s21, 0
      %p132 = por %p130, %p131
      %s133 = ssub.s32 %s15, %s22
      %p134 = scmp.eq.s32.totalorder %s133, 0
      %s136 = sadd.s32 %s135, 1
      %s137 = scalar_select %p134, %s135, %s136
      %p140 = pneg %p134
      %p141 = scmp.eq.s32.totalorder %s15, 1
      %p142 = por %p140, %p141
      %p143 = scmp.ne.s32.totalorder %s135, %s138
      %p144 = scmp.eq.s32.totalorder %s15, 0
      %p145 = por %p143, %p144
      %p146 = scmp.ne.s32.totalorder %s135, %s138
      %p147 = scmp.eq.s32.totalorder %s20, 1
      %p148 = por %p146, %p147
      %p149 = scmp.ne.s32.totalorder %s138, %s139
      %p150 = scmp.eq.s32.totalorder %s20, 0
      %p151 = por %p149, %p150
      %p152 = scmp.ne.s32.totalorder %s138, %s139
      %p153 = scmp.eq.s32.totalorder %s21, 1
      %p154 = por %p152, %p153
      %p156 = scmp.ne.s32.totalorder %s139, %s155
      %p157 = scmp.eq.s32.totalorder %s21, 0
      %p158 = por %p156, %p157
      %p159 = scmp.le.s32.totalorder 1, %s15
      %p160 = scmp.lt.s32.totalorder %s15, 3
      %p161 = pnand %p159, %p160
      %p162 = pneg %p161
      // Predicated region
      $region9: #{tpu_custom_call.1} parent=5 // pred_check
        _
      $region10: #{tpu_custom_call.1} parent=5 // pred_check_branch
        %164 = sbr.rel (%p161) target = $region12
      $region11: #{tpu_custom_call.1} parent=5 // pred_region
        %s165 = ssub.s32 %s15, 1
        // Predicated region
        $region13: #{tpu_custom_call.1} parent=11 // pred_check
          %p166 = pneg %p62
        $region14: #{tpu_custom_call.1} parent=11 // pred_check_branch
          %168 = sbr.rel (%p166) target = $region16
        $region15: #{tpu_custom_call.1} parent=11 // pred_region
          %s170 = ssub.s32 128, 128
          %171 = vsyncadd [#allocation3], %s170
          %s173 = sshll.u32 [#allocation2], 4
          %s174 = int_to_ptr.vmem [resolvable:$true] %s173
          %176 = dma.hbm_to_vmem [thread:$0]  %s1, 128, %s174, [#allocation3]
        $region16: #{tpu_custom_call.1} parent=11 // pred_fallthru
          _
        // Predicated region
        $region17: #{tpu_custom_call.1} parent=11 // pred_check
          %p177 = pneg %p83
        $region18: #{tpu_custom_call.1} parent=11 // pred_check_branch
          %179 = sbr.rel (%p177) target = $region20
        $region19: #{tpu_custom_call.1} parent=11 // pred_region
          _
        $region20: #{tpu_custom_call.1} parent=11 // pred_fallthru
          _
        // Predicated region
        $region21: #{tpu_custom_call.1} parent=11 // pred_check
          %p180 = pneg %p104
        $region22: #{tpu_custom_call.1} parent=11 // pred_check_branch
          %182 = sbr.rel (%p180) target = $region24
        $region23: #{tpu_custom_call.1} parent=11 // pred_region
          _
        $region24: #{tpu_custom_call.1} parent=11 // pred_fallthru
          _
        // Predicated region
        $region25: #{tpu_custom_call.1} parent=11 // pred_check
          %p183 = pneg %p125
        $region26: #{tpu_custom_call.1} parent=11 // pred_check_branch
          %185 = sbr.rel (%p183) target = $region28
        $region27: #{tpu_custom_call.1} parent=11 // pred_region
          _
        $region28: #{tpu_custom_call.1} parent=11 // pred_fallthru
          _
      $region12: #{tpu_custom_call.1} parent=5 // pred_fallthru
        _
      %p186 = scmp.lt.s32.totalorder %s15, 2
      // Predicated region
      $region29: #{tpu_custom_call.1} parent=5 // pred_check
        %p187 = pneg %p186
      $region30: #{tpu_custom_call.1} parent=5 // pred_check_branch
        %189 = sbr.rel (%p187) target = $region32
      $region31: #{tpu_custom_call.1} parent=5 // pred_region
        // Predicated region
        $region33: #{tpu_custom_call.1} parent=31 // pred_check
          %p190 = pneg %p35
        $region34: #{tpu_custom_call.1} parent=31 // pred_check_branch
          %192 = sbr.rel (%p190) target = $region36
        $region35: #{tpu_custom_call.1} parent=31 // pred_region
          %p193 = scmp.lt.s32.totalorder %s15, 1
          %s194 = scalar_select %p193, %s15, 1
          %s195 = smul.addr %s194, 8
          %s196 = scalar_lea.vmem %s0, %s195
        $region36: #{tpu_custom_call.1} parent=31 // pred_fallthru
          _
      $region32: #{tpu_custom_call.1} parent=5 // pred_fallthru
        _
      %p197 = scmp.le.s32.totalorder 1, %s15
      %p198 = scmp.lt.s32.totalorder %s15, 3
      %p199 = pnand %p197, %p198
      %p200 = pneg %p199
      // Predicated region
      $region37: #{tpu_custom_call.1} parent=5 // pred_check
        _
      $region38: #{tpu_custom_call.1} parent=5 // pred_check_branch
        %202 = sbr.rel (%p199) target = $region40
      $region39: #{tpu_custom_call.1} parent=5 // pred_region
        %s203 = ssub.s32 %s15, 1
        // Predicated region
        $region41: #{tpu_custom_call.1} parent=39 // pred_check
          %p204 = pneg %p62
        $region42: #{tpu_custom_call.1} parent=39 // pred_check_branch
          %206 = sbr.rel (%p204) target = $region44
        $region43: #{tpu_custom_call.1} parent=39 // pred_region
          %207 = dma.done [#allocation3], 128
        $region44: #{tpu_custom_call.1} parent=39 // pred_fallthru
          _
        %p208 = scmp.lt.s32.totalorder %s20, 1
        %s209 = scalar_select %p208, %s20, 1
        %s210 = smul.addr %s209, 8
        %s211 = scalar_lea.vmem %s0, %s210
        %p212 = pneg %p41
        %p213 = pneg %p38
        %p214 = pneg %p62
        %p215 = pneg %p59
        %p216 = pneg %p83
        %p217 = pneg %p80
        %p218 = pneg %p104
        %p219 = pneg %p101
        %p220 = pneg %p125
        %p221 = pneg %p122
        %p222 = pneg %p151
        %p223 = pneg %p148
        %s224 = sand.u32 %s138, 1
        %s225 = scalar_lea.sflag [#allocation4], %s224
        %s226 = sand.u32 %s138, 1
        %s227 = smul.addr %s226, 8
        %s228 = scalar_lea.vmem [#allocation5], %s227
        %p229 = scmp.lt.s32.totalorder %s20, 1
        %s230 = scalar_select %p229, %s20, 1
        %s231 = smul.addr %s230, 8
        %s232 = scalar_lea.vmem %s0, %s231
        %v233 = vld [vmem:[%s232] sm:$0xff]
        %v234 = vld [vmem:[#allocation2] sm:$0xff]
        %v235 = vld [vmem:[%s2] sm:$0xff]
        %v236 = vlaneseq
        %v237 = vand.u32 %v236, 127
        %vm238 = vcmask 1047680
        %239 = vrot.lane.b32.xlu0 %v233, 16
        %v240 = vpop.permute.xlu0 %239
        %v241 = vsel %vm238, %v240, %v233
        %242 = vrot.lane.b32.xlu0 %v241, 16
        %v243 = vpop.permute.xlu0 %242
        %v244 = vsel %vm238, %v243, %v233
        %v245 = vadd.s32 %v237, 4294967294
        %vm246 = vcmp.ge.s32.totalorder %v245, 0
        %vm247 = vcmp.lt.s32.totalorder %v245, 16
        %vm248 = vmand %vm246, %vm247
        %250 = vrot.lane.b32.xlu0 %v244, 114
        %v251 = vpop.permute.xlu0 %250
        %v253 = vsel %vm248, %v251, 0.0
        %v254 = vadd.s32 %v237, 4294967295
        %vm255 = vcmp.ge.s32.totalorder %v254, 0
        %vm256 = vcmp.lt.s32.totalorder %v254, 16
        %vm257 = vmand %vm255, %vm256
        %258 = vrot.lane.b32.xlu0 %v244, 113
        %v259 = vpop.permute.xlu0 %258
        %v261 = vsel %vm257, %v259, 0.0
        %v262 = vadd.s32 %v237, 1
        %vm263 = vcmp.ge.s32.totalorder %v262, 0
        %vm264 = vcmp.lt.s32.totalorder %v262, 16
        %vm265 = vmand %vm263, %vm264
        %266 = vrot.lane.b32.xlu0 %v244, 127
        %v267 = vpop.permute.xlu0 %266
        %v269 = vsel %vm265, %v267, 0.0
        %v270 = vadd.s32 %v237, 2
        %vm271 = vcmp.ge.s32.totalorder %v270, 0
        %vm272 = vcmp.lt.s32.totalorder %v270, 16
        %vm273 = vmand %vm271, %vm272
        %274 = vrot.lane.b32.xlu0 %v244, 126
        %v275 = vpop.permute.xlu0 %274
        %v277 = vsel %vm273, %v275, 0.0
        %279 = vset.pattern.permute.xlu0 0
        %280 = vperm.xlu0 %279, %v235
        %v281 = vpop.permute.xlu0 %280
        %vm283 = vcmask 326656
        %v285 = vsel %vm283, %v234, 0
        %287 = vmatprep.subr.mxu0 0.0
        %288 = vmatpush1.msra.mxu0 %v253
        %289 = vmatprep.subr.mxu0 0.0
        %290 = vmatpush1.msra.mxu0 %v261
        %291 = vmatprep.subr.mxu0 0.0
        %292 = vmatpush1.msra.mxu0 %v233
        %293 = vmatprep.subr.mxu0 0.0
        %294 = vmatpush1.msra.mxu0 %v269
        %295 = vmatprep.subr.mxu0 0.0
        %296 = vmatpush1.msra.mxu0 %v277
        %297 = vmatprep.subr.mxu0 0.0
        %298 = vmatpush1.msra.mxu0 0.0
        %299 = vmatprep.subr.mxu0 0.0
        %300 = vmatpush1.msra.mxu0 0.0
        %301 = vmatprep.subr.mxu0 0.0
        %302 = vmatpush1.msra.mxu0 0.0
        %303 = vmatprep.subr.mxu0 0.0
        %304 = vmatpush1.msra.mxu0 0.0
        %305 = vmatprep.subr.mxu0 0.0
        %306 = vmatpush1.msra.mxu0 0.0
        %307 = vmatprep.subr.mxu0 0.0
        %308 = vmatpush1.msra.mxu0 0.0
        %309 = vmatprep.subr.mxu0 0.0
        %310 = vmatpush1.msra.mxu0 0.0
        %311 = vmatprep.subr.mxu0 0.0
        %312 = vmatpush1.msra.mxu0 0.0
        %313 = vmatprep.subr.mxu0 0.0
        %314 = vmatpush1.msra.mxu0 0.0
        %315 = vmatprep.subr.mxu0 0.0
        %316 = vmatpush1.msra.mxu0 0.0
        %317 = vmatprep.subr.mxu0 0.0
        %318 = vmatpush1.msra.mxu0 0.0
        %319 = vmatprep.subr.mxu0 0.0
        %320 = vmatpush1.msra.mxu0 0.0
        %321 = vmatprep.subr.mxu0 0.0
        %322 = vmatpush1.msra.mxu0 0.0
        %323 = vmatprep.subr.mxu0 0.0
        %324 = vmatpush1.msra.mxu0 0.0
        %325 = vmatprep.subr.mxu0 0.0
        %326 = vmatpush1.msra.mxu0 0.0
        %327 = vmatprep.subr.mxu0 0.0
        %328 = vmatpush1.msra.mxu0 0.0
        %329 = vmatprep.subr.mxu0 0.0
        %330 = vmatpush1.msra.mxu0 0.0
        %331 = vmatprep.subr.mxu0 0.0
        %332 = vmatpush1.msra.mxu0 0.0
        %333 = vmatprep.subr.mxu0 0.0
        %334 = vmatpush1.msra.mxu0 0.0
        %335 = vmatprep.subr.mxu0 0.0
        %336 = vmatpush1.msra.mxu0 0.0
        %337 = vmatprep.subr.mxu0 0.0
        %338 = vmatpush1.msra.mxu0 0.0
        %339 = vmatprep.subr.mxu0 0.0
        %340 = vmatpush1.msra.mxu0 0.0
        %341 = vmatprep.subr.mxu0 0.0
        %342 = vmatpush1.msra.mxu0 0.0
        %343 = vmatprep.subr.mxu0 0.0
        %344 = vmatpush1.msra.mxu0 0.0
        %345 = vmatprep.subr.mxu0 0.0
        %346 = vmatpush1.msra.mxu0 0.0
        %347 = vmatprep.subr.mxu0 0.0
        %348 = vmatpush1.msra.mxu0 0.0
        %349 = vmatprep.subr.mxu0 0.0
        %350 = vmatpush1.msra.mxu0 0.0
        %351 = vmatprep.mubr.f32.mxu0 0.0
        %352 = vmatmul.mubr.f32.gmra.mrb[0].mxu0 %v285
        %v353 = vpop.f32.mrb[0].mxu0
        %v354 = vadd.f32 %v281, %v353
        %v355 = vpop.f32.mrb[0].mxu0
        %356 = vdwg.mxu0
        %v357 = vmax.f32 %v354, 0.0
        %v358 = vld [vmem:[%s3] sm:$0xff]
        %v359 = vld [vmem:[%s4] sm:$0xff]
        %360 = vrot.lane.b32.xlu0 %v357, 16
        %v361 = vpop.permute.xlu0 %360
        %v362 = vsel %vm238, %v361, %v357
        %363 = vrot.lane.b32.xlu0 %v362, 16
        %v364 = vpop.permute.xlu0 %363
        %v365 = vsel %vm238, %v364, %v357
        %367 = vrot.lane.b32.xlu0 %v365, 114
        %v368 = vpop.permute.xlu0 %367
        %v370 = vsel %vm248, %v368, 0.0
        %371 = vrot.lane.b32.xlu0 %v365, 113
        %v372 = vpop.permute.xlu0 %371
        %v374 = vsel %vm257, %v372, 0.0
        %375 = vrot.lane.b32.xlu0 %v365, 127
        %v376 = vpop.permute.xlu0 %375
        %v378 = vsel %vm265, %v376, 0.0
        %379 = vrot.lane.b32.xlu0 %v365, 126
        %v380 = vpop.permute.xlu0 %379
        %v382 = vsel %vm273, %v380, 0.0
        %384 = vset.pattern.permute.xlu0 0
        %385 = vperm.xlu0 %384, %v359
        %v386 = vpop.permute.xlu0 %385
        %v389 = vsel %vm283, %v358, 0
        %391 = vmatprep.subr.mxu0 0.0
        %392 = vmatpush1.msra.mxu0 %v370
        %393 = vmatprep.subr.mxu0 0.0
        %394 = vmatpush1.msra.mxu0 %v374
        %395 = vmatprep.subr.mxu0 0.0
        %396 = vmatpush1.msra.mxu0 %v357
        %397 = vmatprep.subr.mxu0 0.0
        %398 = vmatpush1.msra.mxu0 %v378
        %399 = vmatprep.subr.mxu0 0.0
        %400 = vmatpush1.msra.mxu0 %v382
        %401 = vmatprep.subr.mxu0 0.0
        %402 = vmatpush1.msra.mxu0 0.0
        %403 = vmatprep.subr.mxu0 0.0
        %404 = vmatpush1.msra.mxu0 0.0
        %405 = vmatprep.subr.mxu0 0.0
        %406 = vmatpush1.msra.mxu0 0.0
        %407 = vmatprep.subr.mxu0 0.0
        %408 = vmatpush1.msra.mxu0 0.0
        %409 = vmatprep.subr.mxu0 0.0
        %410 = vmatpush1.msra.mxu0 0.0
        %411 = vmatprep.subr.mxu0 0.0
        %412 = vmatpush1.msra.mxu0 0.0
        %413 = vmatprep.subr.mxu0 0.0
        %414 = vmatpush1.msra.mxu0 0.0
        %415 = vmatprep.subr.mxu0 0.0
        %416 = vmatpush1.msra.mxu0 0.0
        %417 = vmatprep.subr.mxu0 0.0
        %418 = vmatpush1.msra.mxu0 0.0
        %419 = vmatprep.subr.mxu0 0.0
        %420 = vmatpush1.msra.mxu0 0.0
        %421 = vmatprep.subr.mxu0 0.0
        %422 = vmatpush1.msra.mxu0 0.0
        %423 = vmatprep.subr.mxu0 0.0
        %424 = vmatpush1.msra.mxu0 0.0
        %425 = vmatprep.subr.mxu0 0.0
        %426 = vmatpush1.msra.mxu0 0.0
        %427 = vmatprep.subr.mxu0 0.0
        %428 = vmatpush1.msra.mxu0 0.0
        %429 = vmatprep.subr.mxu0 0.0
        %430 = vmatpush1.msra.mxu0 0.0
        %431 = vmatprep.subr.mxu0 0.0
        %432 = vmatpush1.msra.mxu0 0.0
        %433 = vmatprep.subr.mxu0 0.0
        %434 = vmatpush1.msra.mxu0 0.0
        %435 = vmatprep.subr.mxu0 0.0
        %436 = vmatpush1.msra.mxu0 0.0
        %437 = vmatprep.subr.mxu0 0.0
        %438 = vmatpush1.msra.mxu0 0.0
        %439 = vmatprep.subr.mxu0 0.0
        %440 = vmatpush1.msra.mxu0 0.0
        %441 = vmatprep.subr.mxu0 0.0
        %442 = vmatpush1.msra.mxu0 0.0
        %443 = vmatprep.subr.mxu0 0.0
        %444 = vmatpush1.msra.mxu0 0.0
        %445 = vmatprep.subr.mxu0 0.0
        %446 = vmatpush1.msra.mxu0 0.0
        %447 = vmatprep.subr.mxu0 0.0
        %448 = vmatpush1.msra.mxu0 0.0
        %449 = vmatprep.subr.mxu0 0.0
        %450 = vmatpush1.msra.mxu0 0.0
        %451 = vmatprep.subr.mxu0 0.0
        %452 = vmatpush1.msra.mxu0 0.0
        %453 = vmatprep.subr.mxu0 0.0
        %454 = vmatpush1.msra.mxu0 0.0
        %455 = vmatprep.mubr.f32.mxu0 0.0
        %456 = vmatmul.mubr.f32.gmra.mrb[0].mxu0 %v389
        %v457 = vpop.f32.mrb[0].mxu0
        %v458 = vadd.f32 %v386, %v457
        %v459 = vpop.f32.mrb[0].mxu0
        %460 = vdwg.mxu0
        %v461 = vmax.f32 %v458, 0.0
        %vm462 = vcmask 130048
        %463 = vst.msk [vmem:[%s228] sm:$0xff] %vm462, %v461
        %s464 = sand.u32 %s138, 1
        %s465 = scalar_lea.sflag [#allocation4], %s464
        %s466 = sand.u32 %s138, 1
        %s467 = smul.addr %s466, 8
        %s468 = scalar_lea.vmem [#allocation5], %s467
        // Predicated region
        $region45: #{tpu_custom_call.1} parent=39 // pred_check
          %p469 = pneg %p148
        $region46: #{tpu_custom_call.1} parent=39 // pred_check_branch
          %471 = sbr.rel (%p469) target = $region48
        $region47: #{tpu_custom_call.1} parent=39 // pred_region
          %s473 = ssub.s32 128, 128
          %474 = vsyncadd %s465, %s473
          %s475 = smul.addr %s20, 128
          %s476 = scalar_lea.hbm %s5, %s475
          %s478 = sshll.u32 %s468, 4
          %s479 = int_to_ptr.vmem [resolvable:$true] %s478
          %481 = dma.vmem_to_hbm [thread:$0]  %s479, 128, %s476, %s465
        $region48: #{tpu_custom_call.1} parent=39 // pred_fallthru
          _
      $region40: #{tpu_custom_call.1} parent=5 // pred_fallthru
        _
      %p482 = scmp.le.s32.totalorder 2, %s15
      // Predicated region
      $region49: #{tpu_custom_call.1} parent=5 // pred_check
        %p483 = pneg %p482
      $region50: #{tpu_custom_call.1} parent=5 // pred_check_branch
        %485 = sbr.rel (%p483) target = $region52
      $region51: #{tpu_custom_call.1} parent=5 // pred_region
        %s486 = ssub.s32 %s15, 2
        // Predicated region
        $region53: #{tpu_custom_call.1} parent=51 // pred_check
          %p487 = pneg %p154
        $region54: #{tpu_custom_call.1} parent=51 // pred_check_branch
          %489 = sbr.rel (%p487) target = $region56
        $region55: #{tpu_custom_call.1} parent=51 // pred_region
          %s490 = sand.u32 %s139, 1
          %s491 = scalar_lea.sflag [#allocation4], %s490
          %s492 = sand.u32 %s139, 1
          %s493 = smul.addr %s492, 8
          %s494 = scalar_lea.vmem [#allocation5], %s493
          %495 = dma.done %s491, 128
        $region56: #{tpu_custom_call.1} parent=51 // pred_fallthru
          _
      $region52: #{tpu_custom_call.1} parent=5 // pred_fallthru
        _
    $region6: #{tpu_custom_call.1} parent=1 // loop_footer
      %s19 = sadd.s32 1, %s15
    $region7: #{tpu_custom_call.1} parent=1 // loop_footer_branch
      %14 = sbr.rel target = $region3
    $region8: #{tpu_custom_call.1} parent=1 // loop_exit
      _
    %496 = vsyncpa [#allocation3], 1
    %s497 = scalar_lea.sflag [#allocation3], 1
    %498 = vsyncpa %s497, 1
    %499 = vsyncpa [#allocation4], 1
    %s500 = scalar_lea.sflag [#allocation4], 1
    %501 = vsyncpa %s500, 1

</llo_original>
